<compile_context>
chip_gen: v5e
topology: v5e:2x2
jax: 0.10.0
libtpu: 0.0.40
codegen_flags: <defaults>
</compile_context>

<pallas_src>
import functools
import math

import jax
import jax.numpy as jnp
from jax.experimental import pallas as pl
from jax.experimental.pallas import tpu as pltpu

# Threshold -> weight map (matches get_weight's default b_dict).
_B_DICT = {0.46: 2.0, 0.55: 5.0, 0.62: 10.0, 0.725: 30.0}
# sqrt folded into the select constants (w >= 0, so |w*a - w*b| == w*|a - b|).
_SQRT_W = tuple((float(k), math.sqrt(float(_B_DICT[k]))) for k in sorted(_B_DICT))

_LANES = 128
_SUBLANES = 8
_MAX_BLOCK_ROWS = 8192                 # 8192 x 128 x 4B = 4 MiB per f32 input block
_VMEM_LIMIT_BYTES = 32 * 1024 * 1024   # explicit; safe on v5e/v6e/v7x


@functools.lru_cache(maxsize=None)
def _device_kind():
    try:
        return jax.devices()[0].device_kind.lower()
    except Exception:
        return ""


@functools.lru_cache(maxsize=None)
def _num_tensorcores():
    """TensorCores per JAX device. Mis-detection only costs perf, never correctness."""
    kind = _device_kind()
    if "v7" in kind:                                  # v7x: 2 TCs per chip
        return 2
    if "v4" in kind or "v5p" in kind:                 # megacore: 2 TCs per device
        return 2
    if "v5" in kind and "lite" not in kind and "v5e" not in kind:
        return 2                                      # v5p sometimes reports "TPU v5"
    return 1                                          # v2/v3 (per-device), v5e, v6e


@functools.lru_cache(maxsize=None)
def _has_bf16_vpu():
    kind = _device_kind()
    return ("v6" in kind) or ("v7" in kind)


def _sublane_multiple(dtype):
    # Packed sublane granularity: 8 rows for 32-bit, 16 for 16-bit, 32 for 8-bit.
    return max(_SUBLANES, 32 // jnp.dtype(dtype).itemsize)


def _bmae_kernel(yp_ref, y_ref, out_ref, acc_ref, *,
                 block_rows, blocks_per_core, valid_rows, needs_mask,
                 native_bf16_chain):
    """Per-core partial sums of w*|yp - y| accumulated into a VMEM (8,128) vector."""
    i = pl.program_id(1)

    @pl.when(i == 0)
    def _():
        acc_ref[...] = jnp.zeros_like(acc_ref)

    if native_bf16_chain:
        # bf16 compare/select/abs halves the per-element VPU cost on chips with
        # bf16 VALUs (v6e/v7x); the accumulation below stays in f32.
        y = y_ref[...]
        yp = yp_ref[...]
        w = jnp.ones_like(y)
        for thr, sw in _SQRT_W:
            w = jnp.where(y >= jnp.asarray(thr, y.dtype), jnp.asarray(sw, y.dtype), w)
        contrib = (w * jnp.abs(yp - y)).astype(jnp.float32)
    else:
        # Cast in-kernel so HBM traffic stays at the input's native width.
        y = y_ref[...].astype(jnp.float32)
        yp = yp_ref[...].astype(jnp.float32)
        # get_weight with sqrt pre-folded: w = 1, then for ascending thresholds
        # k: w[y >= k] = sqrt(b_dict[k])  (higher thresholds overwrite lower).
        w = jnp.ones_like(y)
        for thr, sw in _SQRT_W:
            w = jnp.where(y >= jnp.float32(thr), jnp.float32(sw), w)
        contrib = w * jnp.abs(yp - y)

    if needs_mask:
        # Scalar-gate the tail handling so only boundary / overhang steps pay
        # the iota + compare + select; interior steps take the cheap branch.
        c = pl.program_id(0)
        row_start = (c * blocks_per_core + i) * block_rows

        @pl.when(row_start + block_rows <= valid_rows)
        def _():
            # Group-of-8-sublanes reduce: pure elementwise VPU adds, no
            # cross-lane reduce and no scalar RMW per grid step.
            acc_ref[...] += contrib.reshape(-1, _SUBLANES, _LANES).sum(axis=0)

        @pl.when(row_start + block_rows > valid_rows)
        def _():
            # Rows past the end of the real data (partial final block or a
            # clamped overhang step) hold unspecified values; select them out.
            row_ids = row_start + jax.lax.broadcasted_iota(
                jnp.int32, contrib.shape, 0)
            masked = jnp.where(row_ids < valid_rows, contrib, jnp.float32(0.0))
            acc_ref[...] += masked.reshape(-1, _SUBLANES, _LANES).sum(axis=0)
    else:
        acc_ref[...] += contrib.reshape(-1, _SUBLANES, _LANES).sum(axis=0)

    @pl.when(i == pl.num_programs(1) - 1)
    def _():
        out_ref[...] = acc_ref[...]


@functools.partial(jax.jit, static_argnames=("reduction",))
def bmae_loss(y_pred, y, reduction="mean"):
    if y_pred.shape != y.shape:
        raise ValueError("y_pred and y must have the same shape")
    if reduction not in ("mean", "sum"):
        # TODO(synk): reduction='none' would need an unreduced elementwise output path.
        raise NotImplementedError(
            "Only 'mean' and 'sum' reductions are supported by this kernel.")

    n_elems = y.size
    yp_flat = jnp.ravel(y_pred)
    y_flat = jnp.ravel(y)

    # Zero-copy path: when numel % 128 == 0 the (rows, 128) view is a free
    # reshape. Only lane-ragged inputs pad, and only to the next multiple of
    # 128; zero padding contributes 0 to the sum (w(0)=1, |0-0|=0).
    rem = n_elems % _LANES
    if rem:
        yp_flat = jnp.pad(yp_flat, (0, _LANES - rem))
        y_flat = jnp.pad(y_flat, (0, _LANES - rem))

    rows = yp_flat.size // _LANES
    yp2 = yp_flat.reshape(rows, _LANES)
    y2 = y_flat.reshape(rows, _LANES)

    # Dtype-aware row granularity so 16/8-bit inputs keep their packed sublane
    # tiling intact (8 rows for 32-bit, 16 for 16-bit, 32 for 8-bit).
    sub = max(_sublane_multiple(y_pred.dtype), _sublane_multiple(y.dtype))
    if rows < sub:
        # Tiny input: pad (negligible) so one block is exactly one packed tile.
        yp2 = jnp.pad(yp2, ((0, sub - rows), (0, 0)))
        y2 = jnp.pad(y2, ((0, sub - rows), (0, 0)))
        rows = sub
    block_rows = min(_MAX_BLOCK_ROWS, (rows // sub) * sub)   # multiple of sub, <= rows

    total_blocks = pl.cdiv(rows, block_rows)
    num_cores = min(_num_tensorcores(), total_blocks)        # 1 on v5e/v6e, 2 on v7x/v5p/v4
    blocks_per_core = pl.cdiv(total_blocks, num_cores)
    needs_mask = (num_cores * blocks_per_core * block_rows) != rows

    last_block = total_blocks - 1
    if num_cores * blocks_per_core == total_blocks:
        def in_map(c, i):
            return (c * blocks_per_core + i, 0)
    else:
        # Overhang steps past the last block clamp so the DMA stays in bounds;
        # their contribution is zeroed by the in-kernel row mask.
        def in_map(c, i):
            return (jnp.minimum(c * blocks_per_core + i, last_block), 0)

    native_bf16_chain = (
        y_pred.dtype == jnp.bfloat16 and y.dtype == jnp.bfloat16 and _has_bf16_vpu())

    kernel = functools.partial(
        _bmae_kernel,
        block_rows=block_rows,
        blocks_per_core=blocks_per_core,
        valid_rows=rows,
        needs_mask=needs_mask,
        native_bf16_chain=native_bf16_chain,
    )

    partials = pl.pallas_call(
        kernel,
        out_shape=jax.ShapeDtypeStruct((num_cores * _SUBLANES, _LANES), jnp.float32),
        grid_spec=pltpu.PrefetchScalarGridSpec(
            num_scalar_prefetch=0,
            grid=(num_cores, blocks_per_core),
            in_specs=[
                pl.BlockSpec((block_rows, _LANES), in_map),
                pl.BlockSpec((block_rows, _LANES), in_map),
            ],
            out_specs=pl.BlockSpec((_SUBLANES, _LANES), lambda c, i: (c, 0)),
            scratch_shapes=[pltpu.VMEM((_SUBLANES, _LANES), jnp.float32)],
        ),
        # TODO(synk): on v7x, confirm in a profile that the leading "parallel"
        # axis shards across both TensorCores; if not, switch axis 0 to
        # pltpu.CORE_PARALLEL (or restructure with pl.core_map).
        compiler_params=pltpu.CompilerParams(
            dimension_semantics=("parallel", "arbitrary"),
            vmem_limit_bytes=_VMEM_LIMIT_BYTES,
        ),
    )(yp2, y2)

    total = jnp.sum(partials)
    if reduction == "mean":
        return total / jnp.float32(n_elems)
    return total


def _reference_bmae_loss(y_pred, y, reduction="mean"):
    """Pure-JAX reference matching the PyTorch module."""
    y = y.astype(jnp.float32)
    y_pred = y_pred.astype(jnp.float32)
    w = jnp.ones_like(y)
    for k in sorted(_B_DICT.keys()):
        w = jnp.where(y >= k, _B_DICT[k], w)
    w = jnp.sqrt(w)
    diff = jnp.abs(w * y_pred - w * y)
    return jnp.mean(diff) if reduction == "mean" else jnp.sum(diff)


if __name__ == "__main__":
    key = jax.random.PRNGKey(0)

    shapes = [
        (2, 4, 16, 16),     # single tile, single block, exact fit
        (2, 4, 184, 184),   # numel % 128 == 0, rows ragged -> gated tail mask (no pad copy)
        (1, 4, 416, 416),   # one large streaming block, exact fit
        (2, 3, 7, 11),      # numel % 128 != 0 -> small lane-pad fallback path
        (1, 4, 576, 576),   # multiple blocks per core + partial final block
    ]

    first_loss = None
    for shape in shapes:
        key, k1, k2 = jax.random.split(key, 3)
        y_pred = jax.random.uniform(k1, shape, dtype=jnp.float32)
        y = jax.random.uniform(k2, shape, dtype=jnp.float32)

        loss = bmae_loss(y_pred, y, reduction="mean")
        jax.block_until_ready(loss)
        if first_loss is None:
            first_loss = loss

        ref = _reference_bmae_loss(y_pred, y, reduction="mean")
        assert jnp.allclose(loss, ref, rtol=2e-5, atol=1e-6), (shape, loss, ref)

    # Quick 'sum' reduction check on the primary small shape.
    key, k1, k2 = jax.random.split(key, 3)
    y_pred = jax.random.uniform(k1, (2, 4, 16, 16), dtype=jnp.float32)
    y = jax.random.uniform(k2, (2, 4, 16, 16), dtype=jnp.float32)
    s = bmae_loss(y_pred, y, reduction="sum")
    jax.block_until_ready(s)
    s_ref = _reference_bmae_loss(y_pred, y, reduction="sum")
    assert jnp.allclose(s, s_ref, rtol=2e-5, atol=1e-4), (s, s_ref)

    jax.block_until_ready(first_loss)
    print("KERNEL_OK")
</pallas_src>

<mosaic_0001>
module attributes {stable_mosaic.version = 11 : i64} {
  func.func @_bmae_kernel(%arg0: i32, %arg1: i32, %arg2: memref<16x128xf32, #tpu.memory_space<vmem>>, %arg3: memref<16x128xf32, #tpu.memory_space<vmem>>, %arg4: memref<8x128xf32, #tpu.memory_space<vmem>>, %arg5: memref<8x128xf32, #tpu.memory_space<vmem>>) attributes {dimension_semantics = [#tpu.dimension_semantics<parallel>, #tpu.dimension_semantics<arbitrary>], iteration_bounds = array<i64: 1, 1>, scalar_prefetch = 0 : i64, scratch_operands = 1 : i64, tpu.core_type = #tpu.core_type<tc>, window_params = [{transform_indices = @transform_0, window_bounds = array<i64: 16, 128>}, {transform_indices = @transform_1, window_bounds = array<i64: 16, 128>}, {transform_indices = @transform_2, window_bounds = array<i64: 8, 128>}]} {
    %c0_i32 = arith.constant 0 : i32
    %0 = arith.cmpi eq, %arg1, %c0_i32 : i32
    %1 = arith.extui %0 : i1 to i32
    %c0_i32_0 = arith.constant 0 : i32
    %2 = arith.cmpi ne, %1, %c0_i32_0 : i32
    scf.if %2 {
      %cst_19 = arith.constant 0.000000e+00 : f32
      %33 = vector.broadcast %cst_19 : f32 to vector<8x128xf32>
      %c0_20 = arith.constant 0 : index
      %c0_21 = arith.constant 0 : index
      %34 = vector.load %arg5[%c0_20, %c0_21] : memref<8x128xf32, #tpu.memory_space<vmem>>, vector<8x128xf32>
      tpu.vector_store %arg5[%c0_20, %c0_21], %33 {strides = array<i32>} : memref<8x128xf32, #tpu.memory_space<vmem>>, vector<8x128xf32>,
    } else {
    }
    %c0 = arith.constant 0 : index
    %c0_1 = arith.constant 0 : index
    %3 = vector.load %arg3[%c0, %c0_1] : memref<16x128xf32, #tpu.memory_space<vmem>>, vector<16x128xf32>
    %c0_2 = arith.constant 0 : index
    %c0_3 = arith.constant 0 : index
    %4 = vector.load %arg2[%c0_2, %c0_3] : memref<16x128xf32, #tpu.memory_space<vmem>>, vector<16x128xf32>
    %cst = arith.constant 1.000000e+00 : f32
    %5 = vector.broadcast %cst : f32 to vector<16x128xf32>
    %cst_4 = arith.constant 4.600000e-01 : f32
    %6 = vector.broadcast %cst_4 : f32 to vector<16x128xf32>
    %7 = arith.cmpf oge, %3, %6 : vector<16x128xf32>
    %cst_5 = arith.constant 1.41421354 : f32
    %8 = vector.broadcast %cst_5 : f32 to vector<16x128xf32>
    %9 = arith.select %7, %8, %5 : vector<16x128xi1>, vector<16x128xf32>
    %cst_6 = arith.constant 5.500000e-01 : f32
    %10 = vector.broadcast %cst_6 : f32 to vector<16x128xf32>
    %11 = arith.cmpf oge, %3, %10 : vector<16x128xf32>
    %cst_7 = arith.constant 2.23606801 : f32
    %12 = vector.broadcast %cst_7 : f32 to vector<16x128xf32>
    %13 = arith.select %11, %12, %9 : vector<16x128xi1>, vector<16x128xf32>
    %cst_8 = arith.constant 6.200000e-01 : f32
    %14 = vector.broadcast %cst_8 : f32 to vector<16x128xf32>
    %15 = arith.cmpf oge, %3, %14 : vector<16x128xf32>
    %cst_9 = arith.constant 3.1622777 : f32
    %16 = vector.broadcast %cst_9 : f32 to vector<16x128xf32>
    %17 = arith.select %15, %16, %13 : vector<16x128xi1>, vector<16x128xf32>
    %cst_10 = arith.constant 7.250000e-01 : f32
    %18 = vector.broadcast %cst_10 : f32 to vector<16x128xf32>
    %19 = arith.cmpf oge, %3, %18 : vector<16x128xf32>
    %cst_11 = arith.constant 5.47722578 : f32
    %20 = vector.broadcast %cst_11 : f32 to vector<16x128xf32>
    %21 = arith.select %19, %20, %17 : vector<16x128xi1>, vector<16x128xf32>
    %22 = arith.subf %4, %3 : vector<16x128xf32>
    %23 = math.absf %22 : vector<16x128xf32>
    %24 = arith.mulf %21, %23 : vector<16x128xf32>
    %c0_12 = arith.constant 0 : index
    %c0_13 = arith.constant 0 : index
    %25 = vector.load %arg5[%c0_12, %c0_13] : memref<8x128xf32, #tpu.memory_space<vmem>>, vector<8x128xf32>
    %26 = vector.shape_cast %24 : vector<16x128xf32> to vector<2x8x128xf32>
    %cst_14 = arith.constant dense<0.000000e+00> : vector<8x128xf32>
    %27 = vector.multi_reduction <add>, %26, %cst_14 [0] : vector<2x8x128xf32> to vector<8x128xf32>
    %28 = arith.addf %25, %27 : vector<8x128xf32>
    %c0_15 = arith.constant 0 : index
    %c0_16 = arith.constant 0 : index
    %29 = vector.load %arg5[%c0_15, %c0_16] : memref<8x128xf32, #tpu.memory_space<vmem>>, vector<8x128xf32>
    tpu.vector_store %arg5[%c0_15, %c0_16], %28 {strides = array<i32>} : memref<8x128xf32, #tpu.memory_space<vmem>>, vector<8x128xf32>,
    %c0_i32_17 = arith.constant 0 : i32
    %30 = arith.cmpi eq, %arg1, %c0_i32_17 : i32
    %31 = arith.extui %30 : i1 to i32
    %c0_i32_18 = arith.constant 0 : i32
    %32 = arith.cmpi ne, %31, %c0_i32_18 : i32
    scf.if %32 {
      %c0_19 = arith.constant 0 : index
      %c0_20 = arith.constant 0 : index
      %33 = vector.load %arg5[%c0_19, %c0_20] : memref<8x128xf32, #tpu.memory_space<vmem>>, vector<8x128xf32>
      %c0_21 = arith.constant 0 : index
      %c0_22 = arith.constant 0 : index
      %34 = vector.load %arg4[%c0_21, %c0_22] : memref<8x128xf32, #tpu.memory_space<vmem>>, vector<8x128xf32>
      tpu.vector_store %arg4[%c0_21, %c0_22], %33 {strides = array<i32>} : memref<8x128xf32, #tpu.memory_space<vmem>>, vector<8x128xf32>,
    } else {
    }
    return
  }
  func.func @transform_0(%arg0: i32, %arg1: i32) -> (i32, i32) {
    %c1_i32 = arith.constant 1 : i32
    %0 = arith.muli %arg0, %c1_i32 : i32
    %1 = arith.addi %0, %arg1 : i32
    %c0_i32 = arith.constant 0 : i32
    %c0_i32_0 = arith.constant 0 : i32
    return %1, %c0_i32 : i32, i32
  }
  func.func @transform_1(%arg0: i32, %arg1: i32) -> (i32, i32) {
    %c1_i32 = arith.constant 1 : i32
    %0 = arith.muli %arg0, %c1_i32 : i32
    %1 = arith.addi %0, %arg1 : i32
    %c0_i32 = arith.constant 0 : i32
    %c0_i32_0 = arith.constant 0 : i32
    return %1, %c0_i32 : i32, i32
  }
  func.func @transform_2(%arg0: i32, %arg1: i32) -> (i32, i32) {
    %c0_i32 = arith.constant 0 : i32
    %c0_i32_0 = arith.constant 0 : i32
    return %arg0, %c0_i32 : i32, i32
  }
}

</mosaic_0001>

<llo_original>
// kernel: bmae_loss.1
$region0: #{bmae_loss.1}
  #allocation0 [shape = 'u32[]', space=smem, size = 0x4, offset = 0x4, fixed_abs, tag = 'smem constant byte address 0x4 - core index']
  #allocation1 [shape = 'u32[72,128]{1,0:T(1,128)}', space=vmem, size = 0x9000, scoped, tag = 'internal scratch']
  #allocation2 [shape = 'f32[8,128]{1,0:T(8,128)}', space=vmem, size = 0x1000, scoped, tag = 'scratch operand']
  %s0 = inlined_call_operand.vmem [shape: f32[16,128], index: 0, kind: input, shape index: {}]
  %s1 = inlined_call_operand.vmem [shape: f32[16,128], index: 1, kind: input, shape index: {}]
  %s2 = inlined_call_operand.vmem [shape: f32[8,128], index: 2, kind: output, shape index: {}]
  %s3 = sld [smem:[#allocation0]]
  $region26: #{bmae_loss.1} parent=0
    _
  %s5 = ssub.s32 1, %s3
  %s6 = scalar_select 0, %s5, %s3
  // Predicated region
  $region2: #{bmae_loss.1} parent=0 // pred_check
    _
  $region3: #{bmae_loss.1} parent=0 // pred_check_branch
    %8 = sbr.rel (0) target = $region5
  $region4: #{bmae_loss.1} parent=0 // pred_region
    %s9 = sadd.s32 0, 0
    %s10 = smul.u32 2, %s9
    %p11 = scmp.lt.s32.totalorder %s10, 1
    %s12 = scalar_select %p11, %s10, 1
    %s13 = smul.addr %s12, 8
    %s14 = scalar_lea.vmem %s0, %s13
    %s15 = sadd.s32 0, 0
    %s16 = smul.u32 2, %s15
  $region5: #{bmae_loss.1} parent=0 // pred_fallthru
    _
  // Predicated region
  $region6: #{bmae_loss.1} parent=0 // pred_check
    _
  $region7: #{bmae_loss.1} parent=0 // pred_check_branch
    %18 = sbr.rel (0) target = $region9
  $region8: #{bmae_loss.1} parent=0 // pred_region
    %s19 = sadd.s32 0, 0
    %s20 = smul.u32 2, %s19
    %p21 = scmp.lt.s32.totalorder %s20, 1
    %s22 = scalar_select %p21, %s20, 1
    %s23 = smul.addr %s22, 8
    %s24 = scalar_lea.vmem %s1, %s23
    %s25 = sadd.s32 0, 0
    %s26 = smul.u32 2, %s25
  $region9: #{bmae_loss.1} parent=0 // pred_fallthru
    _
  %s27 = sadd.s32 0, 0
  %s28 = smul.u32 2, %s27
  %p29 = scmp.lt.s32.totalorder %s28, 1
  %s30 = scalar_select %p29, %s28, 1
  %s31 = smul.addr %s30, 8
  %s32 = scalar_lea.vmem %s0, %s31
  %s33 = sadd.s32 0, 0
  %s34 = smul.u32 2, %s33
  %p35 = scmp.lt.s32.totalorder %s34, 1
  %s36 = scalar_select %p35, %s34, 1
  %s37 = smul.addr %s36, 8
  %s38 = scalar_lea.vmem %s1, %s37
  %s39 = sadd.s32 0, 0
  %s40 = smul.u32 2, %s39
  %p41 = scmp.lt.s32.totalorder %s40, 1
  %s42 = scalar_select %p41, %s40, 1
  %s43 = smul.addr %s42, 8
  %s44 = scalar_lea.vmem %s0, %s43
  %s45 = sadd.s32 0, 0
  %s46 = smul.u32 2, %s45
  %s47 = sadd.s32 0, 0
  %s48 = smul.u32 2, %s47
  %p49 = scmp.lt.s32.totalorder %s48, 1
  %s50 = scalar_select %p49, %s48, 1
  %s51 = smul.addr %s50, 8
  %s52 = scalar_lea.vmem %s1, %s51
  %s53 = sadd.s32 0, 0
  %s54 = smul.u32 2, %s53
  %p55 = scmp.eq.s32.totalorder 0, 0
  // Predicated region
  $region10: #{bmae_loss.1} parent=0 // pred_check
    %p56 = pneg %p55
  $region11: #{bmae_loss.1} parent=0 // pred_check_branch
    %58 = sbr.rel (%p56) target = $region13
  $region12: #{bmae_loss.1} parent=0 // pred_region
    %59 = vst [vmem:[#allocation2] sm:$0xff] 0.0
  $region13: #{bmae_loss.1} parent=0 // pred_fallthru
    _
  %v60 = vld [vmem:[%s52] sm:$0xff]
  %v61 = vld [vmem:[%s52 + $0x8] sm:$0xff]
  %v62 = vld [vmem:[%s44] sm:$0xff]
  %v63 = vld [vmem:[%s44 + $0x8] sm:$0xff]
  %vm64 = vcmp.ge.f32.partialorder %v60, 0.46
  %vm65 = vcmp.ge.f32.partialorder %v61, 0.46
  %v66 = vsel %vm64, 1.4142135, 1.0
  %v67 = vsel %vm65, 1.4142135, 1.0
  %vm68 = vcmp.ge.f32.partialorder %v60, 0.55
  %vm69 = vcmp.ge.f32.partialorder %v61, 0.55
  %v70 = vsel %vm68, 2.236068, %v66
  %v71 = vsel %vm69, 2.236068, %v67
  %vm72 = vcmp.ge.f32.partialorder %v60, 0.62
  %vm73 = vcmp.ge.f32.partialorder %v61, 0.62
  %v74 = vsel %vm72, 3.1622777, %v70
  %v75 = vsel %vm73, 3.1622777, %v71
  %vm76 = vcmp.ge.f32.partialorder %v60, 0.725
  %vm77 = vcmp.ge.f32.partialorder %v61, 0.725
  %v78 = vsel %vm76, 5.477226, %v74
  %v79 = vsel %vm77, 5.477226, %v75
  %v80 = vsub.f32 %v62, %v60
  %v81 = vsub.f32 %v63, %v61
  %v82 = vand.u32 2147483647, %v80
  %v83 = vand.u32 2147483647, %v81
  %v84 = vmul.f32 %v78, %v82
  %v85 = vmul.f32 %v79, %v83
  %v86 = vld [vmem:[#allocation2] sm:$0xff]
  %v87 = vadd.f32 %v84, %v85
  %v88 = vadd.f32 %v86, %v87
  %89 = vst [vmem:[#allocation2] sm:$0xff] %v88
  // Predicated region
  $region14: #{bmae_loss.1} parent=0 // pred_check
    %p90 = pneg %p55
  $region15: #{bmae_loss.1} parent=0 // pred_check_branch
    %92 = sbr.rel (%p90) target = $region17
  $region16: #{bmae_loss.1} parent=0 // pred_region
    %v93 = vld [vmem:[#allocation2] sm:$0xff]
    %94 = vst [vmem:[%s2] sm:$0xff] %v93
  $region17: #{bmae_loss.1} parent=0 // pred_fallthru
    _
  // Predicated region
  $region18: #{bmae_loss.1} parent=0 // pred_check
    _
  $region19: #{bmae_loss.1} parent=0 // pred_check_branch
    %96 = sbr.rel (0) target = $region21
  $region20: #{bmae_loss.1} parent=0 // pred_region
    _
  $region21: #{bmae_loss.1} parent=0 // pred_fallthru
    _
  // Predicated region
  $region22: #{bmae_loss.1} parent=0 // pred_check
    _
  $region23: #{bmae_loss.1} parent=0 // pred_check_branch
    %98 = sbr.rel (0) target = $region25
  $region24: #{bmae_loss.1} parent=0 // pred_region
    _
  $region25: #{bmae_loss.1} parent=0 // pred_fallthru
    _

</llo_original>
